<compile_context>
chip_gen: v6e
topology: v6e:2x2x1
jax: 0.10.0
libtpu: 0.0.40
codegen_flags: <defaults>
</compile_context>

<pallas_src>
import functools

import jax
import jax.numpy as jnp
from jax.experimental import pallas as pl
from jax.experimental.pallas import tpu as pltpu

_SUBLANES = 8
_LANES = 128


def _round_up(x, m):
    return ((x + m - 1) // m) * m


def _cdiv(a, b):
    return -(-a // b)


def _focal_terms_sum(logits, targets, gamma):
    """Pure-XLA sum of (1 - p_t)^gamma * (-log(clamp(p_t))) over all elements."""
    x = logits.reshape(-1).astype(jnp.float32)
    t = targets.reshape(-1).astype(jnp.float32)
    p = 1.0 / (1.0 + jnp.exp(-x))
    p_t = jnp.where(t >= 0.5, p, 1.0 - p)
    logp = -jnp.log(jnp.clip(p_t, 1e-4, 1.0 - 1e-4))
    return jnp.sum((1.0 - p_t) ** gamma * logp, dtype=jnp.float32)


def _focal_kernel(x_ref, t_ref, out_ref, *, gamma, block_rows, strip_rows, cols,
                  total_rows):
    """One (block_rows, cols) tile -> (8, cols) partial sum of focal terms."""
    nstrips = block_rows // strip_rows
    slabs = strip_rows // _SUBLANES

    if total_rows is not None:
        # Only the last grid step can hang past the real row count; rows in the
        # over-hang read unspecified data and are zeroed out below.
        base_row = pl.program_id(0) * block_rows
        local_row = jax.lax.broadcasted_iota(jnp.int32, (strip_rows, cols), 0)

    def strip_loss(x, t):
        x = x.astype(jnp.float32)
        t = t.astype(jnp.float32)
        # Same op order as the PyTorch module; reciprocal (exact) instead of a
        # full f32 divide keeps VPU work down while preserving 1e-5 parity.
        p = pl.reciprocal(1.0 + jnp.exp(-x), approx=False)
        p_t = jnp.where(t >= 0.5, p, 1.0 - p)
        logp = -jnp.log(jnp.clip(p_t, 1e-4, 1.0 - 1e-4))
        one_minus_pt = 1.0 - p_t
        if gamma == 2.0:                       # default path: pure VPU
            mod = one_minus_pt * one_minus_pt
        elif gamma == 1.0:
            mod = one_minus_pt
        else:                                  # general static gamma (> 0)
            mod = one_minus_pt ** gamma
        return mod * logp

    def body(s, acc):
        r0 = pl.multiple_of(s * strip_rows, strip_rows)
        loss = strip_loss(x_ref[pl.ds(r0, strip_rows), :],
                          t_ref[pl.ds(r0, strip_rows), :])
        if total_rows is not None:
            valid = (base_row + r0 + local_row) < total_rows
            loss = jnp.where(valid, loss, 0.0)
        # (strip_rows, cols) -> (8, cols) via sublane-tile-aligned vreg adds.
        for k in range(slabs):
            acc = acc + loss[k * _SUBLANES:(k + 1) * _SUBLANES, :]
        return acc

    acc0 = jnp.zeros((_SUBLANES, cols), jnp.float32)
    out_ref[...] = jax.lax.fori_loop(0, nstrips, body, acc0)


def focal_loss_for_multilabel(logits, targets, *, num_labels=122, alpha=0.25,
                              gamma=2.0, block_rows=8192, use_pallas=None,
                              min_pallas_elements=128 * 1024):
    """Pallas TPU forward pass of FocalLossForMultiLabel (returns an f32 scalar)."""
    assert logits.shape == targets.shape, (logits.shape, targets.shape)
    n = int(logits.size)
    scale = jnp.float32(num_labels) * jnp.float32(alpha) / jnp.float32(n)

    cols = int(logits.shape[-1]) if logits.ndim >= 2 else n
    rows = n // cols if cols else 0

    # 2-D row-tiling path only when the last dim is reasonably lane-dense.
    pallas_ok = logits.ndim >= 2 and 32 <= cols <= 65536 and rows >= 1
    if use_pallas is None:
        go_pallas = pallas_ok and n >= min_pallas_elements
    else:
        go_pallas = bool(use_pallas) and pallas_ok
    if not go_pallas:
        # TODO(synk): very lane-sparse (last dim < 32) or 1-D inputs stay on the
        # fused XLA path instead of a lane-repacked Pallas kernel.
        return _focal_terms_sum(logits, targets, gamma) * scale

    x2 = logits.reshape(rows, cols)      # free reshape for contiguous inputs
    t2 = targets.reshape(rows, cols)

    # Row-tile sizing: multiple of the sublane pack (32 for sub-4-byte streams),
    # capped by a ~24 MiB double-buffer budget, halved until the grid has >= 2
    # steps so both v7x TensorCores get work.
    x_isz = jnp.dtype(x2.dtype).itemsize
    t_isz = jnp.dtype(t2.dtype).itemsize
    min_tb = 32 if min(x_isz, t_isz) < 4 else _SUBLANES
    lane_cols = _round_up(cols, _LANES)
    stream_bytes_per_row = lane_cols * (x_isz + t_isz)
    max_tb_vmem = max(
        min_tb,
        (24 * 1024 * 1024 // (2 * stream_bytes_per_row)) // min_tb * min_tb)

    tb = max(min_tb, (int(block_rows) // min_tb) * min_tb)
    tb = min(tb, max_tb_vmem, _round_up(rows, min_tb))
    while _cdiv(rows, tb) < 2 and tb > min_tb:
        tb = max(min_tb, (tb // 2 // min_tb) * min_tb)
    grid = _cdiv(rows, tb)

    strip = next(s for s in (64, 32, 16, 8) if tb % s == 0)
    total_rows = rows if rows % tb != 0 else None   # None -> no in-kernel mask

    kernel = functools.partial(
        _focal_kernel, gamma=float(gamma), block_rows=tb, strip_rows=strip,
        cols=cols, total_rows=total_rows)

    partials = pl.pallas_call(
        kernel,
        out_shape=jax.ShapeDtypeStruct((grid * _SUBLANES, cols), jnp.float32),
        grid=(grid,),
        in_specs=[
            pl.BlockSpec((tb, cols), lambda i: (i, 0)),
            pl.BlockSpec((tb, cols), lambda i: (i, 0)),
        ],
        out_specs=pl.BlockSpec((_SUBLANES, cols), lambda i: (i, 0)),
        compiler_params=pltpu.CompilerParams(
            dimension_semantics=("parallel",),   # independent partial per step
            vmem_limit_bytes=32 * 1024 * 1024,   # 2 inputs x 2 bufs x 4 MiB fits v5e
        ),
    )(x2, t2)

    # Tiny final reduction + alpha / num_labels / mean scaling outside the kernel.
    return jnp.sum(partials, dtype=jnp.float32) * scale


def _reference(logits, targets, *, num_labels, alpha, gamma):
    n = logits.size
    return (jnp.float32(num_labels) * jnp.float32(alpha)
            * _focal_terms_sum(logits, targets, gamma) / jnp.float32(n))


if __name__ == "__main__":
    key = jax.random.PRNGKey(0)
    ks = jax.random.split(key, 6)
    num_labels, alpha, gamma = 122, 0.25, 2.0

    def make(kl, kt, batch):
        logits = jax.random.normal(kl, (batch, num_labels), dtype=jnp.float32) * 2.0
        targets = (jax.random.uniform(kt, (batch, num_labels)) > 0.5).astype(jnp.float32)
        return logits, targets

    # 1) Tiny input -> auto path (fused XLA fast path below the Pallas crossover).
    l1, t1 = make(ks[0], ks[1], 8)
    out1 = jax.block_until_ready(focal_loss_for_multilabel(
        l1, t1, num_labels=num_labels, alpha=alpha, gamma=gamma))
    ref1 = _reference(l1, t1, num_labels=num_labels, alpha=alpha, gamma=gamma)
    assert jnp.allclose(out1, ref1, rtol=1e-5, atol=1e-5), (out1, ref1)

    # 2) Forced Pallas path with a ragged row tail (exercises in-kernel masking).
    l2, t2 = make(ks[2], ks[3], 37)
    out2 = jax.block_until_ready(focal_loss_for_multilabel(
        l2, t2, num_labels=num_labels, alpha=alpha, gamma=gamma, use_pallas=True))
    ref2 = _reference(l2, t2, num_labels=num_labels, alpha=alpha, gamma=gamma)
    assert jnp.allclose(out2, ref2, rtol=1e-5, atol=1e-5), (out2, ref2)

    # 3) Forced Pallas path, rows divide the block (no masking), bf16 logit stream.
    l3, t3 = make(ks[4], ks[5], 64)
    l3_bf16 = l3.astype(jnp.bfloat16)              # producer-side cast (halves bytes)
    out3 = jax.block_until_ready(focal_loss_for_multilabel(
        l3_bf16, t3, num_labels=num_labels, alpha=alpha, gamma=gamma, use_pallas=True))
    ref3 = _reference(l3_bf16.astype(jnp.float32), t3,
                      num_labels=num_labels, alpha=alpha, gamma=gamma)
    assert jnp.allclose(out3, ref3, rtol=1e-5, atol=1e-5), (out3, ref3)

    print("KERNEL_OK")
</pallas_src>

<mosaic_0001>
module attributes {stable_mosaic.version = 11 : i64} {
  func.func @_focal_kernel(%arg0: i32, %arg1: memref<16x122xf32, #tpu.memory_space<vmem>>, %arg2: memref<16x122xf32, #tpu.memory_space<vmem>>, %arg3: memref<8x122xf32, #tpu.memory_space<vmem>>) attributes {dimension_semantics = [#tpu.dimension_semantics<parallel>], iteration_bounds = array<i64: 3>, scalar_prefetch = 0 : i64, scratch_operands = 0 : i64, tpu.core_type = #tpu.core_type<tc>, window_params = [{transform_indices = @transform_0, window_bounds = array<i64: 16, 122>}, {transform_indices = @transform_1, window_bounds = array<i64: 16, 122>}, {transform_indices = @transform_2, window_bounds = array<i64: 8, 122>}]} {
    %c16_i32 = arith.constant 16 : i32
    %0 = arith.muli %arg0, %c16_i32 : i32
    %1 = tpu.iota {dimensions = array<i32: 0>} : vector<16x122xi32>
    %cst = arith.constant 0.000000e+00 : f32
    %2 = vector.broadcast %cst : f32 to vector<8x122xf32>
    %c0_i32 = arith.constant 0 : i32
    %c16_i32_0 = arith.constant 16 : i32
    %3 = arith.muli %c0_i32, %c16_i32_0 : i32
    %4 = tpu.assume_multiple %3, 16 : i32
    %5 = arith.index_cast %4 : i32 to index
    %c0 = arith.constant 0 : index
    %6 = vector.load %arg1[%5, %c0] : memref<16x122xf32, #tpu.memory_space<vmem>>, vector<16x122xf32>
    %7 = arith.index_cast %4 : i32 to index
    %c0_1 = arith.constant 0 : index
    %8 = vector.load %arg2[%7, %c0_1] : memref<16x122xf32, #tpu.memory_space<vmem>>, vector<16x122xf32>
    %cst_2 = arith.constant 0.000000e+00 : f32
    %9 = vector.broadcast %cst_2 : f32 to vector<16x122xf32>
    %10 = arith.subf %9, %6 : vector<16x122xf32>
    %11 = math.exp %10 : vector<16x122xf32>
    %cst_3 = arith.constant 1.000000e+00 : f32
    %12 = vector.broadcast %cst_3 : f32 to vector<16x122xf32>
    %13 = arith.addf %12, %11 : vector<16x122xf32>
    %14 = tpu.reciprocal %13 : vector<16x122xf32> -> vector<16x122xf32>
    %cst_4 = arith.constant 5.000000e-01 : f32
    %15 = vector.broadcast %cst_4 : f32 to vector<16x122xf32>
    %16 = arith.cmpf oge, %8, %15 : vector<16x122xf32>
    %cst_5 = arith.constant 1.000000e+00 : f32
    %17 = vector.broadcast %cst_5 : f32 to vector<16x122xf32>
    %18 = arith.subf %17, %14 : vector<16x122xf32>
    %19 = arith.select %16, %14, %18 : vector<16x122xi1>, vector<16x122xf32>
    %cst_6 = arith.constant 9.99999974E-5 : f32
    %cst_7 = arith.constant 0.999899983 : f32
    %20 = vector.broadcast %cst_6 : f32 to vector<16x122xf32>
    %21 = arith.maximumf %20, %19 : vector<16x122xf32>
    %22 = vector.broadcast %cst_7 : f32 to vector<16x122xf32>
    %23 = arith.minimumf %22, %21 : vector<16x122xf32>
    %24 = math.log %23 : vector<16x122xf32>
    %cst_8 = arith.constant 0.000000e+00 : f32
    %25 = vector.broadcast %cst_8 : f32 to vector<16x122xf32>
    %26 = arith.subf %25, %24 : vector<16x122xf32>
    %cst_9 = arith.constant 1.000000e+00 : f32
    %27 = vector.broadcast %cst_9 : f32 to vector<16x122xf32>
    %28 = arith.subf %27, %19 : vector<16x122xf32>
    %29 = arith.mulf %28, %28 : vector<16x122xf32>
    %30 = arith.mulf %29, %26 : vector<16x122xf32>
    %31 = arith.addi %0, %4 : i32
    %32 = vector.broadcast %31 : i32 to vector<16x122xi32>
    %33 = arith.addi %32, %1 : vector<16x122xi32>
    %c37_i32 = arith.constant 37 : i32
    %34 = vector.broadcast %c37_i32 : i32 to vector<16x122xi32>
    %35 = arith.cmpi slt, %33, %34 : vector<16x122xi32>
    %cst_10 = arith.constant 0.000000e+00 : f32
    %36 = vector.broadcast %cst_10 : f32 to vector<16x122xf32>
    %37 = arith.select %35, %30, %36 : vector<16x122xi1>, vector<16x122xf32>
    %38 = vector.extract_strided_slice %37 {offsets = [0, 0], sizes = [8, 122], strides = [1, 1]} : vector<16x122xf32> to vector<8x122xf32>
    %39 = arith.addf %2, %38 : vector<8x122xf32>
    %40 = vector.extract_strided_slice %37 {offsets = [8, 0], sizes = [8, 122], strides = [1, 1]} : vector<16x122xf32> to vector<8x122xf32>
    %41 = arith.addf %39, %40 : vector<8x122xf32>
    %c1_i32 = arith.constant 1 : i32
    %c0_11 = arith.constant 0 : index
    %c0_12 = arith.constant 0 : index
    %42 = vector.load %arg3[%c0_11, %c0_12] : memref<8x122xf32, #tpu.memory_space<vmem>>, vector<8x122xf32>
    tpu.vector_store %arg3[%c0_11, %c0_12], %41 {strides = array<i32>} : memref<8x122xf32, #tpu.memory_space<vmem>>, vector<8x122xf32>,
    return
  }
  func.func @transform_0(%arg0: i32) -> (i32, i32) {
    %c0_i32 = arith.constant 0 : i32
    %c0_i32_0 = arith.constant 0 : i32
    return %arg0, %c0_i32 : i32, i32
  }
  func.func @transform_1(%arg0: i32) -> (i32, i32) {
    %c0_i32 = arith.constant 0 : i32
    %c0_i32_0 = arith.constant 0 : i32
    return %arg0, %c0_i32 : i32, i32
  }
  func.func @transform_2(%arg0: i32) -> (i32, i32) {
    %c0_i32 = arith.constant 0 : i32
    %c0_i32_0 = arith.constant 0 : i32
    return %arg0, %c0_i32 : i32, i32
  }
}

</mosaic_0001>

<llo_original>
// kernel: tpu_custom_call.1
$region0: #{tpu_custom_call.1}
  #allocation0 [shape = 'u32[]', space=smem, size = 0x4, offset = 0x4, fixed_abs, tag = 'smem constant byte address 0x4 - core index']
  #allocation1 [shape = 'u32[144,128]{1,0:T(1,128)}', space=vmem, size = 0x12000, scoped, tag = 'internal scratch']
  %s0 = inlined_call_operand.hbm [shape: f32[37,122], index: 0, kind: input, shape index: {}]
  %s1 = inlined_call_operand.hbm [shape: f32[37,122], index: 1, kind: input, shape index: {}]
  %s2 = inlined_call_operand.hbm [shape: f32[24,122], index: 2, kind: output, shape index: {}]
  %s3 = sld [smem:[#allocation0]]
  $region49: #{tpu_custom_call.1} parent=0
    _
  %s5 = ssub.s32 1, %s3
  %s6 = scalar_select 0, %s5, %s3
  $region1: #{tpu_custom_call.1} parent=0
    #allocation2 [shape = 'u8[16384]{0}', space=vmem, size = 0x4000, scoped, tag = 'input window, operand 0']
    #allocation3 [shape = 's32[2]{0}', space=sflag, size = 0x8, scoped, tag = 'scoped memory for tpu_custom_call.1']
    #allocation4 [shape = 's32[2]{0}', space=sflag, size = 0x8, scoped, tag = 'scoped memory for tpu_custom_call.1']
    #allocation5 [shape = 'u8[16384]{0}', space=vmem, size = 0x4000, scoped, tag = 'input window, operand 1']
    #allocation6 [shape = 's32[2]{0}', space=sflag, size = 0x8, scoped, tag = 'scoped memory for tpu_custom_call.1']
    #allocation7 [shape = 'u8[8192]{0}', space=vmem, size = 0x2000, scoped, tag = 'output window, operand 0']
    %7 = vsyncpa [#allocation3], 0
    %s8 = scalar_lea.sflag [#allocation3], 1
    %9 = vsyncpa %s8, 0
    %10 = vsyncpa [#allocation6], 0
    %s11 = scalar_lea.sflag [#allocation6], 1
    %12 = vsyncpa %s11, 0
    %13 = vsyncpa [#allocation4], 0
    %s14 = scalar_lea.sflag [#allocation4], 1
    %15 = vsyncpa %s14, 0
    loop: start=0, step=1, limit=5
    $region2: #{tpu_custom_call.1} parent=1 // loop_pre_header
      _
    $region3: #{tpu_custom_call.1} parent=1 // loop_header
      %s17 = sphi 0, %s21
      %p18 = scmp.ge.s32.totalorder %s17, 5
      %s27 = sphi 0, %s29
      %s30 = sphi 0, %s27
      %s31 = sphi 0, %s30
      %s47 = sphi 0, %s31
      %s53 = sphi 0, %s55
      %s56 = sphi 0, %s53
      %s57 = sphi 0, %s56
      %s73 = sphi 0, %s57
      %s79 = sphi 0, %s81
      %s82 = sphi 0, %s79
      %s83 = sphi 0, %s82
      %s99 = sphi 0, %s83
    $region4: #{tpu_custom_call.1} parent=1 // loop_header_branch
      %20 = sbr.rel (%p18) target = $region8
    $region5: #{tpu_custom_call.1} parent=1 // loop_body
      %s22 = ssub.s32 %s17, 1
      %s23 = ssub.s32 %s17, 2
      %s24 = sadd.s32 %s17, 1
      %s25 = ssub.s32 %s17, %s24
      %p26 = scmp.eq.s32.totalorder %s25, 0
      %s28 = sadd.s32 %s27, 1
      %s29 = scalar_select %p26, %s27, %s28
      %p32 = pneg %p26
      %p33 = scmp.eq.s32.totalorder %s17, 2
      %p34 = por %p32, %p33
      %p35 = scmp.ne.s32.totalorder %s27, %s30
      %p36 = scmp.eq.s32.totalorder %s17, 0
      %p37 = por %p35, %p36
      %p38 = scmp.ne.s32.totalorder %s27, %s30
      %p39 = scmp.eq.s32.totalorder %s22, 2
      %p40 = por %p38, %p39
      %p41 = scmp.ne.s32.totalorder %s30, %s31
      %p42 = scmp.eq.s32.totalorder %s22, 0
      %p43 = por %p41, %p42
      %p44 = scmp.ne.s32.totalorder %s30, %s31
      %p45 = scmp.eq.s32.totalorder %s23, 2
      %p46 = por %p44, %p45
      %p48 = scmp.ne.s32.totalorder %s31, %s47
      %p49 = scmp.eq.s32.totalorder %s23, 0
      %p50 = por %p48, %p49
      %s51 = ssub.s32 %s17, %s24
      %p52 = scmp.eq.s32.totalorder %s51, 0
      %s54 = sadd.s32 %s53, 1
      %s55 = scalar_select %p52, %s53, %s54
      %p58 = pneg %p52
      %p59 = scmp.eq.s32.totalorder %s17, 2
      %p60 = por %p58, %p59
      %p61 = scmp.ne.s32.totalorder %s53, %s56
      %p62 = scmp.eq.s32.totalorder %s17, 0
      %p63 = por %p61, %p62
      %p64 = scmp.ne.s32.totalorder %s53, %s56
      %p65 = scmp.eq.s32.totalorder %s22, 2
      %p66 = por %p64, %p65
      %p67 = scmp.ne.s32.totalorder %s56, %s57
      %p68 = scmp.eq.s32.totalorder %s22, 0
      %p69 = por %p67, %p68
      %p70 = scmp.ne.s32.totalorder %s56, %s57
      %p71 = scmp.eq.s32.totalorder %s23, 2
      %p72 = por %p70, %p71
      %p74 = scmp.ne.s32.totalorder %s57, %s73
      %p75 = scmp.eq.s32.totalorder %s23, 0
      %p76 = por %p74, %p75
      %s77 = ssub.s32 %s17, %s24
      %p78 = scmp.eq.s32.totalorder %s77, 0
      %s80 = sadd.s32 %s79, 1
      %s81 = scalar_select %p78, %s79, %s80
      %p84 = pneg %p78
      %p85 = scmp.eq.s32.totalorder %s17, 2
      %p86 = por %p84, %p85
      %p87 = scmp.ne.s32.totalorder %s79, %s82
      %p88 = scmp.eq.s32.totalorder %s17, 0
      %p89 = por %p87, %p88
      %p90 = scmp.ne.s32.totalorder %s79, %s82
      %p91 = scmp.eq.s32.totalorder %s22, 2
      %p92 = por %p90, %p91
      %p93 = scmp.ne.s32.totalorder %s82, %s83
      %p94 = scmp.eq.s32.totalorder %s22, 0
      %p95 = por %p93, %p94
      %p96 = scmp.ne.s32.totalorder %s82, %s83
      %p97 = scmp.eq.s32.totalorder %s23, 2
      %p98 = por %p96, %p97
      %p100 = scmp.ne.s32.totalorder %s83, %s99
      %p101 = scmp.eq.s32.totalorder %s23, 0
      %p102 = por %p100, %p101
      %p103 = scmp.le.s32.totalorder 1, %s17
      %p104 = scmp.lt.s32.totalorder %s17, 4
      %p105 = pnand %p103, %p104
      %p106 = pneg %p105
      // Predicated region
      $region9: #{tpu_custom_call.1} parent=5 // pred_check
        _
      $region10: #{tpu_custom_call.1} parent=5 // pred_check_branch
        %108 = sbr.rel (%p105) target = $region12
      $region11: #{tpu_custom_call.1} parent=5 // pred_region
        %s109 = ssub.s32 %s17, 1
      $region12: #{tpu_custom_call.1} parent=5 // pred_fallthru
        _
      %p110 = scmp.lt.s32.totalorder %s17, 3
      // Predicated region
      $region13: #{tpu_custom_call.1} parent=5 // pred_check
        %p111 = pneg %p110
      $region14: #{tpu_custom_call.1} parent=5 // pred_check_branch
        %113 = sbr.rel (%p111) target = $region16
      $region15: #{tpu_custom_call.1} parent=5 // pred_region
        // Predicated region
        $region17: #{tpu_custom_call.1} parent=15 // pred_check
          %p114 = pneg %p37
        $region18: #{tpu_custom_call.1} parent=15 // pred_check_branch
          %116 = sbr.rel (%p114) target = $region20
        $region19: #{tpu_custom_call.1} parent=15 // pred_region
          %s117 = sand.u32 %s27, 1
          %s118 = scalar_lea.sflag [#allocation3], %s117
          %s119 = sand.u32 %s27, 1
          %s120 = smul.addr %s119, 16
          %s121 = scalar_lea.vmem [#allocation2], %s120
          %s122 = smul.u32 2, %s17
          %s123 = ssub.s32 5, %s122
          %p124 = scmp.lt.s32.totalorder %s123, 2
          %s125 = scalar_select %p124, %s123, 2
          %s126 = smul.u32 128, %s125
          %s128 = ssub.s32 256, %s126
          %129 = vsyncadd %s118, %s128
          %p130 = scmp.ne.s32.totalorder 0, %s126
          %s131 = smul.addr %s122, 128
          %s132 = scalar_lea.hbm %s0, %s131
          %s133 = smul.u32 8, %s125
          %s134 = sshll.u32 %s121, 4
          %s135 = int_to_ptr.vmem [resolvable:$true] %s134
          %s136 = sshll.u32 %s133, 4
          %140 = dma.hbm_to_vmem [thread:$0]  (%p130), %s132, %s136, %s135, %s118, 128, 128, 8
        $region20: #{tpu_custom_call.1} parent=15 // pred_fallthru
          _
        // Predicated region
        $region21: #{tpu_custom_call.1} parent=15 // pred_check
          %p141 = pneg %p63
        $region22: #{tpu_custom_call.1} parent=15 // pred_check_branch
          %143 = sbr.rel (%p141) target = $region24
        $region23: #{tpu_custom_call.1} parent=15 // pred_region
          %s144 = sand.u32 %s53, 1
          %s145 = scalar_lea.sflag [#allocation6], %s144
          %s146 = sand.u32 %s53, 1
          %s147 = smul.addr %s146, 16
          %s148 = scalar_lea.vmem [#allocation5], %s147
          %s149 = smul.u32 2, %s17
          %s150 = ssub.s32 5, %s149
          %p151 = scmp.lt.s32.totalorder %s150, 2
          %s152 = scalar_select %p151, %s150, 2
          %s153 = smul.u32 128, %s152
          %s155 = ssub.s32 256, %s153
          %156 = vsyncadd %s145, %s155
          %p157 = scmp.ne.s32.totalorder 0, %s153
          %s158 = smul.addr %s149, 128
          %s159 = scalar_lea.hbm %s1, %s158
          %s160 = smul.u32 8, %s152
          %s161 = sshll.u32 %s148, 4
          %s162 = int_to_ptr.vmem [resolvable:$true] %s161
          %s163 = sshll.u32 %s160, 4
          %167 = dma.hbm_to_vmem [thread:$0]  (%p157), %s159, %s163, %s162, %s145, 128, 128, 8
        $region24: #{tpu_custom_call.1} parent=15 // pred_fallthru
          _
      $region16: #{tpu_custom_call.1} parent=5 // pred_fallthru
        _
      %p168 = scmp.le.s32.totalorder 1, %s17
      %p169 = scmp.lt.s32.totalorder %s17, 4
      %p170 = pnand %p168, %p169
      %p171 = pneg %p170
      // Predicated region
      $region25: #{tpu_custom_call.1} parent=5 // pred_check
        _
      $region26: #{tpu_custom_call.1} parent=5 // pred_check_branch
        %173 = sbr.rel (%p170) target = $region28
      $region27: #{tpu_custom_call.1} parent=5 // pred_region
        %s174 = ssub.s32 %s17, 1
        %s175 = sand.u32 %s30, 1
        %s176 = scalar_lea.sflag [#allocation3], %s175
        %s177 = sand.u32 %s30, 1
        %s178 = smul.addr %s177, 16
        %s179 = scalar_lea.vmem [#allocation2], %s178
        // Predicated region
        $region29: #{tpu_custom_call.1} parent=27 // pred_check
          %p180 = pneg %p43
        $region30: #{tpu_custom_call.1} parent=27 // pred_check_branch
          %182 = sbr.rel (%p180) target = $region32
        $region31: #{tpu_custom_call.1} parent=27 // pred_region
          %183 = dma.done %s176, 256
        $region32: #{tpu_custom_call.1} parent=27 // pred_fallthru
          _
        %s184 = sand.u32 %s56, 1
        %s185 = scalar_lea.sflag [#allocation6], %s184
        %s186 = sand.u32 %s56, 1
        %s187 = smul.addr %s186, 16
        %s188 = scalar_lea.vmem [#allocation5], %s187
        // Predicated region
        $region33: #{tpu_custom_call.1} parent=27 // pred_check
          %p189 = pneg %p69
        $region34: #{tpu_custom_call.1} parent=27 // pred_check_branch
          %191 = sbr.rel (%p189) target = $region36
        $region35: #{tpu_custom_call.1} parent=27 // pred_region
          %192 = dma.done %s185, 256
        $region36: #{tpu_custom_call.1} parent=27 // pred_fallthru
          _
        %s193 = sand.u32 %s30, 1
        %s194 = scalar_lea.sflag [#allocation3], %s193
        %s195 = sand.u32 %s30, 1
        %s196 = smul.addr %s195, 16
        %s197 = scalar_lea.vmem [#allocation2], %s196
        %p198 = pneg %p43
        %p199 = pneg %p40
        %s200 = sand.u32 %s56, 1
        %s201 = scalar_lea.sflag [#allocation6], %s200
        %s202 = sand.u32 %s56, 1
        %s203 = smul.addr %s202, 16
        %s204 = scalar_lea.vmem [#allocation5], %s203
        %p205 = pneg %p69
        %p206 = pneg %p66
        %p207 = pneg %p95
        %p208 = pneg %p92
        %s209 = sand.u32 %s82, 1
        %s210 = scalar_lea.sflag [#allocation4], %s209
        %s211 = sand.u32 %s82, 1
        %s212 = smul.addr %s211, 8
        %s213 = scalar_lea.vmem [#allocation7], %s212
        %s214 = smul.u32 2, %s22
        %s215 = ssub.s32 5, %s214
        %p216 = scmp.lt.s32.totalorder %s215, 2
        %s217 = scalar_select %p216, %s215, 2
        %s218 = smul.u32 128, %s217
        %s219 = smul.u32 2, %s22
        %s220 = ssub.s32 5, %s219
        %p221 = scmp.lt.s32.totalorder %s220, 2
        %s222 = scalar_select %p221, %s220, 2
        %s223 = smul.u32 128, %s222
        %s224 = smul.u32 %s22, 16
        %v225 = vlaneseq
        %v226 = vshrl.u32 %v225, 7
        %v227 = vadd.s32 %v226, 8
        %v228 = vld [vmem:[%s179] sm:$0xff]
        %v229 = vld [vmem:[%s179 + $0x8] sm:$0xff]
        %v230 = vld [vmem:[%s188] sm:$0xff]
        %v231 = vld [vmem:[%s188 + $0x8] sm:$0xff]
        %v232 = vsub.f32 0.0, %v228
        %v233 = vsub.f32 0.0, %v229
        %v234 = vmul.f32 %v232, 1.442695
        %v235 = vpow.pop %v234
        %v236 = vmul.f32 %v233, 1.442695
        %v237 = vpow.pop %v236
        %v238 = vadd.f32 %v235, 1.0
        %v239 = vadd.f32 %v237, 1.0
        %v240 = vrcp.pop %v238
        %v241 = vrcp.pop %v239
        %vm242 = vcmp.ge.f32.partialorder %v230, 0.5
        %vm243 = vcmp.ge.f32.partialorder %v231, 0.5
        %v244 = vsub.f32 1.0, %v240
        %v245 = vsub.f32 1.0, %v241
        %v246 = vsel %vm242, %v240, %v244
        %v247 = vsel %vm243, %v241, %v245
        %v248 = vmax.f32 %v246, 0.0001
        %v249 = vmax.f32 %v247, 0.0001
        %v250 = vmin.f32 %v248, 0.9999
        %v251 = vmin.f32 %v249, 0.9999
        %v252 = vlog2.pop %v250
        %v253 = vmul.f32 %v252, 0.6931472
        %v254 = vlog2.pop %v251
        %v255 = vmul.f32 %v254, 0.6931472
        %v256 = vsub.f32 0.0, %v253
        %v257 = vsub.f32 0.0, %v255
        %v258 = vsub.f32 1.0, %v246
        %v259 = vsub.f32 1.0, %v247
        %v260 = vmul.f32 %v258, %v258
        %v261 = vmul.f32 %v259, %v259
        %v262 = vmul.f32 %v260, %v256
        %v263 = vmul.f32 %v261, %v257
        %s264 = sadd.s32 %s224, 0
        %v265 = vstv %s264
        %v266 = vadd.s32 %v265, %v226
        %v267 = vadd.s32 %v265, %v227
        %vm268 = vcmp.lt.s32.totalorder %v266, 37
        %vm269 = vcmp.lt.s32.totalorder %v267, 37
        %v270 = vsel %vm268, %v262, 0.0
        %v271 = vsel %vm269, %v263, 0.0
        %v272 = vadd.f32 %v270, 0.0
        %v273 = vadd.f32 %v272, %v271
        %vm274 = vcmask 998400
        %275 = vst.msk [vmem:[%s213] sm:$0xff] %vm274, %v273
        %s276 = sand.u32 %s82, 1
        %s277 = scalar_lea.sflag [#allocation4], %s276
        %s278 = sand.u32 %s82, 1
        %s279 = smul.addr %s278, 8
        %s280 = scalar_lea.vmem [#allocation7], %s279
        // Predicated region
        $region37: #{tpu_custom_call.1} parent=27 // pred_check
          %p281 = pneg %p92
        $region38: #{tpu_custom_call.1} parent=27 // pred_check_branch
          %283 = sbr.rel (%p281) target = $region40
        $region39: #{tpu_custom_call.1} parent=27 // pred_region
          %s285 = ssub.s32 128, 128
          %286 = vsyncadd %s277, %s285
          %s287 = smul.addr %s22, 128
          %s288 = scalar_lea.hbm %s2, %s287
          %s290 = sshll.u32 %s280, 4
          %s291 = int_to_ptr.vmem [resolvable:$true] %s290
          %293 = dma.vmem_to_hbm [thread:$0]  %s291, 128, %s288, %s277
        $region40: #{tpu_custom_call.1} parent=27 // pred_fallthru
          _
      $region28: #{tpu_custom_call.1} parent=5 // pred_fallthru
        _
      %p294 = scmp.le.s32.totalorder 2, %s17
      // Predicated region
      $region41: #{tpu_custom_call.1} parent=5 // pred_check
        %p295 = pneg %p294
      $region42: #{tpu_custom_call.1} parent=5 // pred_check_branch
        %297 = sbr.rel (%p295) target = $region44
      $region43: #{tpu_custom_call.1} parent=5 // pred_region
        %s298 = ssub.s32 %s17, 2
        // Predicated region
        $region45: #{tpu_custom_call.1} parent=43 // pred_check
          %p299 = pneg %p98
        $region46: #{tpu_custom_call.1} parent=43 // pred_check_branch
          %301 = sbr.rel (%p299) target = $region48
        $region47: #{tpu_custom_call.1} parent=43 // pred_region
          %s302 = sand.u32 %s83, 1
          %s303 = scalar_lea.sflag [#allocation4], %s302
          %s304 = sand.u32 %s83, 1
          %s305 = smul.addr %s304, 8
          %s306 = scalar_lea.vmem [#allocation7], %s305
          %307 = dma.done %s303, 128
        $region48: #{tpu_custom_call.1} parent=43 // pred_fallthru
          _
      $region44: #{tpu_custom_call.1} parent=5 // pred_fallthru
        _
    $region6: #{tpu_custom_call.1} parent=1 // loop_footer
      %s21 = sadd.s32 1, %s17
    $region7: #{tpu_custom_call.1} parent=1 // loop_footer_branch
      %16 = sbr.rel target = $region3
    $region8: #{tpu_custom_call.1} parent=1 // loop_exit
      _
    %308 = vsyncpa [#allocation3], 1
    %s309 = scalar_lea.sflag [#allocation3], 1
    %310 = vsyncpa %s309, 1
    %311 = vsyncpa [#allocation6], 1
    %s312 = scalar_lea.sflag [#allocation6], 1
    %313 = vsyncpa %s312, 1
    %314 = vsyncpa [#allocation4], 1
    %s315 = scalar_lea.sflag [#allocation4], 1
    %316 = vsyncpa %s315, 1

</llo_original>
